<compile_context>
chip_gen: v7x
topology: tpu7x:2x2x1
jax: 0.10.0
libtpu: 0.0.40
codegen_flags: <defaults>
</compile_context>

<pallas_src>
import functools

import jax
import jax.numpy as jnp
from jax import lax
from jax.experimental import pallas as pl
from jax.experimental.pallas import tpu as pltpu

# --- hyper-parameters (match TalkingHeadAttention.__init__) -------------------
DIM_KEY = 16
DIM_VALUE = 16
DIM_MODEL = 32
N_HEAD = 4
N_HEAD_H = 2
DROPOUT_RATE = 0.0  # dropout branch disabled (deterministic forward)

_HDK = DIM_KEY * N_HEAD     # 64
_HDV = DIM_VALUE * N_HEAD   # 64
_NCONST = 4 + 2 * N_HEAD_H  # rows of the packed constant slab (= 8)


# --- shared attention + output-projection body (operates on VMEM scratch slabs) ---------
def _attend_and_project(consts_ref, wo_ref, bo_ref, out_ref,
                        qp_scr, kp_scr, vp_scr, comb_scr,
                        *, bt, lq, lk, lv, mxu_dtype, unroll):
    f32 = jnp.float32
    # packed constants (lane-broadcast over Dk/Dv lanes); layout defined in prepare_params.
    wl_m = consts_ref[3:3 + N_HEAD_H, :].astype(mxu_dtype)       # wl * dk^-0.5
    ww = consts_ref[3 + N_HEAD_H:3 + 2 * N_HEAD_H, :]            # fc_w weight (f32)
    bw = consts_ref[3 + 2 * N_HEAD_H:4 + 2 * N_HEAD_H, :]        # fc_w bias   (f32)
    dn = (((1,), (1,)), ((), ()))                                # contract packed feature axis

    def body(b, carry):
        dyn = not isinstance(b, int)
        rq, rk, rv = b * lq, b * lk, b * lv
        if dyn and lq % 8 == 0:
            rq = pl.multiple_of(rq, 8)
        if dyn and lk % 8 == 0:
            rk = pl.multiple_of(rk, 8)
        if dyn and lv % 8 == 0:
            rv = pl.multiple_of(rv, 8)
        qb = qp_scr[pl.ds(rq, lq), :]                            # [Lq, H*Dk] (mxu_dtype)
        kb = kp_scr[pl.ds(rk, lk), :]                            # [Lk, H*Dk]
        vb = vp_scr[pl.ds(rv, lv), :]                            # [Lv, H*Dv]

        # fold scale + fc_l weights into Q and stack the H_h mixed variants along rows ->
        # all mixed score maps come from ONE MXU op.  (fc_l bias is a constant shift along
        # the key axis -> softmax-invariant -> dropped; valid because attn_bias is None.)
        qmix = jnp.concatenate([qb * wl_m[hh:hh + 1, :] for hh in range(N_HEAD_H)], axis=0)
        s = lax.dot_general(qmix, kb, dn, preferred_element_type=f32)   # [H_h*Lq, Lk]

        # softmax over keys (f32 VPU math; EUP approx reciprocal is ~free).
        m = jnp.max(s, axis=-1, keepdims=True)
        e = jnp.exp(s - m)
        p = e * pl.reciprocal(jnp.sum(e, axis=-1, keepdims=True), approx=True)

        # all (hh, head) context pieces with ONE MXU op, fc_w applied on the VPU:
        #   ctx_h = sum_hh ww[h,hh] * (M_hh @ V_h) + bw[h] * colsum(V_h)
        cvx = jnp.dot(p.astype(mxu_dtype), vb, preferred_element_type=f32)  # [H_h*Lq, H*Dv]
        ctx = bw * jnp.sum(vb.astype(f32), axis=0, keepdims=True)           # [1, H*Dv]
        for hh in range(N_HEAD_H):
            ctx = ctx + ww[hh:hh + 1, :] * cvx[hh * lq:(hh + 1) * lq, :]    # [Lq, H*Dv]
        comb_scr[pl.ds(rq, lq), :] = ctx.astype(comb_scr.dtype)             # bounded liveness
        return carry

    if unroll:                       # tiny tiles: static unroll (LLO scheduler visibility)
        for b in range(bt):
            body(b, 0)
    else:                            # larger tiles: keep one iteration live at a time
        lax.fori_loop(0, bt, body, 0)

    # output projection straight from the scratch slab: one [bt*Lq, H*Dv] @ [H*Dv, Dm].
    out_ref[...] = (jnp.dot(comb_scr[...], wo_ref[...], preferred_element_type=f32)
                    + bo_ref[...])


# --- general kernel: distinct Q / K / V inputs -------------------------------------------
def _tha_kernel(q_ref, k_ref, v_ref, wqkv_ref, consts_ref, wo_ref, bo_ref, out_ref,
                qp_scr, kp_scr, vp_scr, comb_scr, *, bt, lq, lk, lv, mxu_dtype, unroll):
    f32 = jnp.float32
    bqkv = consts_ref[0:3, :]
    # Q/K/V projections: one flattened matmul each over all bt*L rows; bias add in f32;
    # operands cast to mxu_dtype ONCE (hoisted out of the batch loop) as they land in VMEM.
    qp_scr[...] = (jnp.dot(q_ref[...].astype(mxu_dtype), wqkv_ref[0],
                           preferred_element_type=f32) + bqkv[0:1, :]).astype(qp_scr.dtype)
    kp_scr[...] = (jnp.dot(k_ref[...].astype(mxu_dtype), wqkv_ref[1],
                           preferred_element_type=f32) + bqkv[1:2, :]).astype(kp_scr.dtype)
    vp_scr[...] = (jnp.dot(v_ref[...].astype(mxu_dtype), wqkv_ref[2],
                           preferred_element_type=f32) + bqkv[2:3, :]).astype(vp_scr.dtype)
    _attend_and_project(consts_ref, wo_ref, bo_ref, out_ref,
                        qp_scr, kp_scr, vp_scr, comb_scr,
                        bt=bt, lq=lq, lk=lk, lv=lv, mxu_dtype=mxu_dtype, unroll=unroll)


# --- self-attention kernel: one activation, fused [32, 192] projection -------------------
def _tha_self_kernel(x_ref, wqkv_ref, consts_ref, wo_ref, bo_ref, out_ref,
                     qp_scr, kp_scr, vp_scr, comb_scr, *, bt, l, mxu_dtype, unroll):
    f32 = jnp.float32
    bqkv = consts_ref[0:3, :]
    # one [bt*L, 32] @ [32, 192] MXU push; slice the 192 lanes into q/k/v afterwards.
    proj = jnp.dot(x_ref[...].astype(mxu_dtype), wqkv_ref[...], preferred_element_type=f32)
    qp_scr[...] = (proj[:, 0:_HDK] + bqkv[0:1, :]).astype(qp_scr.dtype)
    kp_scr[...] = (proj[:, _HDK:2 * _HDK] + bqkv[1:2, :]).astype(kp_scr.dtype)
    vp_scr[...] = (proj[:, 2 * _HDK:2 * _HDK + _HDV] + bqkv[2:3, :]).astype(vp_scr.dtype)
    _attend_and_project(consts_ref, wo_ref, bo_ref, out_ref,
                        qp_scr, kp_scr, vp_scr, comb_scr,
                        bt=bt, lq=l, lk=l, lv=l, mxu_dtype=mxu_dtype, unroll=unroll)


# --- parameter repacking (torch layout -> kernel layout), done once outside the kernel ---
def prepare_params(params, mxu_dtype=jnp.float32):
    scale = DIM_KEY ** (-0.5)
    wq_t, wk_t, wv_t = params["wq"].T, params["wk"].T, params["wv"].T          # [Dm, H*Dk]
    wqkv = jnp.stack([wq_t, wk_t, wv_t]).astype(mxu_dtype)                     # [3, Dm, H*Dk]
    wqkv_fused = jnp.concatenate([wq_t, wk_t, wv_t], axis=1).astype(mxu_dtype) # [Dm, 3*H*Dk]
    bqkv = jnp.stack([params["bq"], params["bk"], params["bv"]])               # [3, H*Dk]
    wl_scale = jnp.repeat(params["wl"] * scale, DIM_KEY, axis=1)               # [H_h, H*Dk]
    ww_lanes = jnp.repeat(params["ww"].T, DIM_VALUE, axis=1)                   # [H_h, H*Dv]
    bw_lanes = jnp.repeat(params["bw"], DIM_VALUE)[None, :]                    # [1, H*Dv]
    consts = jnp.concatenate([bqkv, wl_scale, ww_lanes, bw_lanes],
                             axis=0).astype(jnp.float32)                       # [8, H*Dk]
    return dict(
        wqkv=wqkv, wqkv_fused=wqkv_fused, consts=consts,
        wo_t=params["wo"].T.astype(mxu_dtype),                                 # [H*Dv, Dm]
        bo=params["bo"][None, :].astype(jnp.float32),                          # [1, Dm]
    )


# --- VMEM-aware batch-block selection ----------------------------------------------------
def _vmem_bytes_estimate(bt, lq, lk, lv, in_itemsize, mxu_itemsize):
    dm, hd = DIM_MODEL, _HDK
    inputs = 2 * bt * (lq + lk + lv) * dm * in_itemsize                 # double-buffered inputs
    output = 2 * bt * lq * dm * 4
    scratch = bt * (lq + lk + lv + lq) * hd * mxu_itemsize              # qp/kp/vp/comb slabs
    live = 3 * N_HEAD_H * lq * lk * 4 + 2 * N_HEAD_H * lq * hd * 4      # s/e/p + qmix/cvx temps
    weights = 2 * (3 * dm * hd + hd * dm) * mxu_itemsize + 2 * (_NCONST * hd + dm) * 4
    return inputs + output + scratch + live + weights


def _pick_batch_block(B, lq, lk, lv, in_itemsize, mxu_itemsize, cap, vmem_budget):
    best = None
    for d in range(1, B + 1):
        if B % d or d > cap:
            continue
        if (d * lq) % 8 or (d * lk) % 8 or (d * lv) % 8:
            continue  # keep row blocks sublane-aligned (8-row tiles)
        if _vmem_bytes_estimate(d, lq, lk, lv, in_itemsize, mxu_itemsize) > vmem_budget:
            continue
        if B // d < 2 and best is not None:
            continue  # prefer a grid of length >= 2 (v7x: 2 TensorCores; also pipelining)
        best = d
    if best is None:
        if lq % 8 == 0 and lk % 8 == 0 and lv % 8 == 0:
            # TODO(synk): very long sequences should add a key-block grid axis + online softmax.
            best = 1
        else:
            # TODO(synk): unaligned rows; fall back to one full-extent block.
            best = B
    return best


# --- wrapper -----------------------------------------------------------------------------
def talking_head_attention(queries, keys, values, params, mask=None, attn_bias=None,
                           *, mxu_dtype=jnp.float32, batch_block_cap=None):
    # TODO(synk): attn_bias add path not implemented; the torch forward is exercised with
    #             attn_bias=None (mask is unused by the torch forward; cache=None).
    assert attn_bias is None
    del mask

    self_attn = keys is None and values is None
    keys_a = queries if keys is None else keys
    values_a = keys_a if values is None else values

    B, Lq, Dm = queries.shape
    Lk, Lv = keys_a.shape[1], values_a.shape[1]
    assert Dm == DIM_MODEL and Lk == Lv
    assert _HDK == _HDV  # packed projection / constant layout assumes Dk*H == Dv*H

    prepped = prepare_params(params, mxu_dtype)
    bf16_inputs = jnp.dtype(mxu_dtype) == jnp.dtype(jnp.bfloat16)
    in_dtype = jnp.bfloat16 if bf16_inputs else queries.dtype   # halve input DMA on v6e/v7x
    in_itemsize = jnp.dtype(in_dtype).itemsize
    mxu_itemsize = jnp.dtype(mxu_dtype).itemsize

    cap = batch_block_cap
    if cap is None:
        cap = 32 if max(Lq, Lk) <= 16 else 8     # big blocks amortize ~0.35us/step at tiny L
    vmem_budget = 20 * 2**20                     # conservative so tiling also fits v7x VMEM
    bt = _pick_batch_block(B, Lq, Lk, Lv, in_itemsize, mxu_itemsize, cap, vmem_budget)
    grid = (B // bt,)
    unroll = max(Lq, Lk) <= 16 and bt <= 16      # static unroll only for tiny tiles

    est = _vmem_bytes_estimate(bt, Lq, Lk, Lv, in_itemsize, mxu_itemsize)
    compiler_params = pltpu.CompilerParams(
        dimension_semantics=("parallel",),
        vmem_limit_bytes=int(min(64 * 2**20, max(16 * 2**20, 2 * est))),
    )
    cost = pl.CostEstimate(
        flops=int(2 * B * ((Lq + Lk + Lv) * Dm * _HDK
                           + N_HEAD_H * Lq * Lk * (_HDK + _HDV)
                           + Lq * _HDV * Dm)),
        transcendentals=int(B * N_HEAD_H * Lq * (Lk + 1)),
        bytes_accessed=int(B * (Lq + Lk + Lv) * Dm * in_itemsize
                           + B * Lq * Dm * 4
                           + (3 * Dm * _HDK + _HDV * Dm) * mxu_itemsize
                           + (_NCONST * _HDK + Dm) * 4),
    )

    scratch_shapes = [
        pltpu.VMEM((bt * Lq, _HDK), mxu_dtype),   # projected Q
        pltpu.VMEM((bt * Lk, _HDK), mxu_dtype),   # projected K
        pltpu.VMEM((bt * Lv, _HDV), mxu_dtype),   # projected V
        pltpu.VMEM((bt * Lq, _HDV), mxu_dtype),   # combined per-head contexts (feeds W_o)
    ]

    def const_spec(shape):
        return pl.BlockSpec(shape, lambda i: (0,) * len(shape))

    out_spec = pl.BlockSpec((bt * Lq, Dm), lambda i: (i, 0))
    out_shape = jax.ShapeDtypeStruct((B * Lq, Dm), jnp.float32)

    if self_attn:
        x2 = queries.reshape(B * Lq, Dm).astype(in_dtype)
        kernel = functools.partial(_tha_self_kernel, bt=bt, l=Lq,
                                   mxu_dtype=mxu_dtype, unroll=unroll)
        out2 = pl.pallas_call(
            kernel,
            grid=grid,
            in_specs=[
                pl.BlockSpec((bt * Lq, Dm), lambda i: (i, 0)),   # activation (loaded once)
                const_spec((Dm, 3 * _HDK)),                      # fused W_q|W_k|W_v
                const_spec((_NCONST, _HDK)),                     # packed biases / fc_l / fc_w
                const_spec((_HDV, Dm)),                          # W_o (pre-transposed)
                const_spec((1, Dm)),                             # b_o
            ],
            out_specs=out_spec,
            out_shape=out_shape,
            scratch_shapes=scratch_shapes,
            compiler_params=compiler_params,
            cost_estimate=cost,
        )(x2, prepped["wqkv_fused"], prepped["consts"], prepped["wo_t"], prepped["bo"])
    else:
        q2 = queries.reshape(B * Lq, Dm).astype(in_dtype)
        k2 = keys_a.reshape(B * Lk, Dm).astype(in_dtype)
        v2 = values_a.reshape(B * Lv, Dm).astype(in_dtype)
        kernel = functools.partial(_tha_kernel, bt=bt, lq=Lq, lk=Lk, lv=Lv,
                                   mxu_dtype=mxu_dtype, unroll=unroll)
        out2 = pl.pallas_call(
            kernel,
            grid=grid,
            in_specs=[
                pl.BlockSpec((bt * Lq, Dm), lambda i: (i, 0)),   # queries (row blocks)
                pl.BlockSpec((bt * Lk, Dm), lambda i: (i, 0)),   # keys
                pl.BlockSpec((bt * Lv, Dm), lambda i: (i, 0)),   # values
                const_spec((3, Dm, _HDK)),                       # packed W_q/W_k/W_v
                const_spec((_NCONST, _HDK)),                     # packed biases / fc_l / fc_w
                const_spec((_HDV, Dm)),                          # W_o (pre-transposed)
                const_spec((1, Dm)),                             # b_o
            ],
            out_specs=out_spec,
            out_shape=out_shape,
            scratch_shapes=scratch_shapes,
            compiler_params=compiler_params,
            cost_estimate=cost,
        )(q2, k2, v2, prepped["wqkv"], prepped["consts"], prepped["wo_t"], prepped["bo"])
    return out2.reshape(B, Lq, Dm)


# --- pure-JAX reference (mirrors the torch forward) --------------------------------------
def reference(queries, keys, values, params):
    B, Lq, _ = queries.shape
    Lk, Lv = keys.shape[1], values.shape[1]
    q = queries @ params["wq"].T + params["bq"]
    k = keys @ params["wk"].T + params["bk"]
    v = values @ params["wv"].T + params["bv"]
    q = q.reshape(B, Lq, N_HEAD, DIM_KEY).transpose(0, 2, 1, 3)
    k = k.reshape(B, Lk, N_HEAD, DIM_KEY).transpose(0, 2, 1, 3)
    v = v.reshape(B, Lv, N_HEAD, DIM_VALUE).transpose(0, 2, 1, 3)
    scaled_q = DIM_KEY ** (-0.5) * q
    product = jnp.einsum("bhqd,bhkd->bhqk", scaled_q, k)
    product = product.transpose(0, 2, 3, 1)                    # [B, Lq, Lk, H]
    product = product @ params["wl"].T + params["bl"]          # [B, Lq, Lk, H_h]
    weights = jax.nn.softmax(product, axis=2)                  # softmax over keys
    weights = weights @ params["ww"].T + params["bw"]          # [B, Lq, Lk, H]
    weights = weights.transpose(0, 3, 1, 2)                    # [B, H, Lq, Lk]
    out = jnp.einsum("bhqk,bhkd->bhqd", weights, v)
    comb = out.transpose(0, 2, 1, 3).reshape(B, Lq, N_HEAD * DIM_VALUE)
    return comb @ params["wo"].T + params["bo"]


# --- deterministic parameter init (torch Linear layout: weight [out, in], 1-D bias) ------
def init_params(key):
    ks = jax.random.split(key, 12)
    w = lambda k, shape: (0.05 * jax.random.normal(k, shape)).astype(jnp.float32)
    return dict(
        wq=w(ks[0], (DIM_KEY * N_HEAD, DIM_MODEL)),    bq=w(ks[1], (DIM_KEY * N_HEAD,)),
        wk=w(ks[2], (DIM_KEY * N_HEAD, DIM_MODEL)),    bk=w(ks[3], (DIM_KEY * N_HEAD,)),
        wv=w(ks[4], (DIM_VALUE * N_HEAD, DIM_MODEL)),  bv=w(ks[5], (DIM_VALUE * N_HEAD,)),
        wl=w(ks[6], (N_HEAD_H, N_HEAD)),               bl=w(ks[7], (N_HEAD_H,)),
        ww=w(ks[8], (N_HEAD, N_HEAD_H)),               bw=w(ks[9], (N_HEAD,)),
        wo=w(ks[10], (DIM_MODEL, DIM_VALUE * N_HEAD)), bo=w(ks[11], (DIM_MODEL,)),
    )


if __name__ == "__main__":
    key = jax.random.PRNGKey(0)
    kq, kk, kv, kpar, kq2, kk2, kv2 = jax.random.split(key, 7)
    B, L = 2, 8
    queries = jax.random.normal(kq, (B, L, DIM_MODEL), dtype=jnp.float32)
    keys = jax.random.normal(kk, (B, L, DIM_MODEL), dtype=jnp.float32)
    values = jax.random.normal(kv, (B, L, DIM_MODEL), dtype=jnp.float32)
    params = init_params(kpar)

    ref = reference(queries, keys, values, params)

    # 1) general path, f32 MXU (exact up to the approximate EUP reciprocal in softmax)
    out = talking_head_attention(queries, keys, values, params, mask=None, attn_bias=None)
    out = jax.block_until_ready(out)
    if out.shape != (B, L, DIM_MODEL) or not jnp.allclose(out, ref, atol=1e-3, rtol=1e-3):
        raise AssertionError("f32 Pallas kernel output does not match JAX reference")

    # 2) fused self-attention path (keys=None, values=None -> torch substitutes queries)
    ref_self = reference(queries, queries, queries, params)
    out_self = jax.block_until_ready(
        talking_head_attention(queries, None, None, params, mask=None, attn_bias=None))
    if not jnp.allclose(out_self, ref_self, atol=1e-3, rtol=1e-3):
        raise AssertionError("self-attention Pallas kernel output does not match JAX reference")

    # 3) bf16 MXU-operand path (recommended on v6e/v7x; f32 accumulation + f32 softmax)
    out_bf16 = jax.block_until_ready(
        talking_head_attention(queries, keys, values, params, mask=None, attn_bias=None,
                               mxu_dtype=jnp.bfloat16))
    if not jnp.allclose(out_bf16, ref, atol=5e-3, rtol=5e-2):
        raise AssertionError("bf16-MXU Pallas kernel output does not match JAX reference")

    # 4) larger shape: exercises bt>1 batch blocking + the fori_loop (non-unrolled) path
    B2, L2 = 4, 32
    q_l = jax.random.normal(kq2, (B2, L2, DIM_MODEL), dtype=jnp.float32)
    k_l = jax.random.normal(kk2, (B2, L2, DIM_MODEL), dtype=jnp.float32)
    v_l = jax.random.normal(kv2, (B2, L2, DIM_MODEL), dtype=jnp.float32)
    ref_l = reference(q_l, k_l, v_l, params)
    out_l = jax.block_until_ready(
        talking_head_attention(q_l, k_l, v_l, params, mask=None, attn_bias=None))
    if not jnp.allclose(out_l, ref_l, atol=2e-3, rtol=2e-3):
        raise AssertionError("large-shape Pallas kernel output does not match JAX reference")

    print("KERNEL_OK")
</pallas_src>

<mosaic_0001>
module attributes {stable_mosaic.version = 11 : i64} {
  func.func @_tha_kernel(%arg0: i32, %arg1: memref<8x32xf32, #tpu.memory_space<vmem>>, %arg2: memref<8x32xf32, #tpu.memory_space<vmem>>, %arg3: memref<8x32xf32, #tpu.memory_space<vmem>>, %arg4: memref<3x32x64xf32, #tpu.memory_space<vmem>>, %arg5: memref<8x64xf32, #tpu.memory_space<vmem>>, %arg6: memref<64x32xf32, #tpu.memory_space<vmem>>, %arg7: memref<1x32xf32, #tpu.memory_space<vmem>>, %arg8: memref<8x32xf32, #tpu.memory_space<vmem>>, %arg9: memref<8x64xf32, #tpu.memory_space<vmem>>, %arg10: memref<8x64xf32, #tpu.memory_space<vmem>>, %arg11: memref<8x64xf32, #tpu.memory_space<vmem>>, %arg12: memref<8x64xf32, #tpu.memory_space<vmem>>) attributes {dimension_semantics = [#tpu.dimension_semantics<parallel>], iteration_bounds = array<i64: 2>, scalar_prefetch = 0 : i64, scratch_operands = 4 : i64, tpu.core_type = #tpu.core_type<tc>, window_params = [{transform_indices = @transform_0, window_bounds = array<i64: 8, 32>}, {transform_indices = @transform_1, window_bounds = array<i64: 8, 32>}, {transform_indices = @transform_2, window_bounds = array<i64: 8, 32>}, {pipeline_mode = #tpu.pipeline_mode<synchronous>, transform_indices = @transform_3, window_bounds = array<i64: 3, 32, 64>}, {pipeline_mode = #tpu.pipeline_mode<synchronous>, transform_indices = @transform_4, window_bounds = array<i64: 8, 64>}, {pipeline_mode = #tpu.pipeline_mode<synchronous>, transform_indices = @transform_5, window_bounds = array<i64: 64, 32>}, {pipeline_mode = #tpu.pipeline_mode<synchronous>, transform_indices = @transform_6, window_bounds = array<i64: 1, 32>}, {transform_indices = @transform_7, window_bounds = array<i64: 8, 32>}]} {
    %c0 = arith.constant 0 : index
    %c0_0 = arith.constant 0 : index
    %0 = vector.load %arg5[%c0, %c0_0] : memref<8x64xf32, #tpu.memory_space<vmem>>, vector<3x64xf32>
    %c0_1 = arith.constant 0 : index
    %c0_2 = arith.constant 0 : index
    %1 = vector.load %arg1[%c0_1, %c0_2] : memref<8x32xf32, #tpu.memory_space<vmem>>, vector<8x32xf32>
    %c0_3 = arith.constant 0 : index
    %c0_4 = arith.constant 0 : index
    %c0_5 = arith.constant 0 : index
    %2 = vector.load %arg4[%c0_3, %c0_4, %c0_5] : memref<3x32x64xf32, #tpu.memory_space<vmem>>, vector<1x32x64xf32>
    %3 = vector.shape_cast %2 : vector<1x32x64xf32> to vector<32x64xf32>
    %cst = arith.constant dense<0.000000e+00> : vector<8x64xf32>
    %4 = tpu.matmul %1, %3, %cst {dimension_numbers = #tpu.dot_dimension_numbers<[1], [0], [0], [1], [0, 0, 1, 1], [], []>} : vector<8x32xf32>, vector<32x64xf32>, vector<8x64xf32> -> vector<8x64xf32>
    %5 = vector.extract_strided_slice %0 {offsets = [0, 0], sizes = [1, 64], strides = [1, 1]} : vector<3x64xf32> to vector<1x64xf32>
    %6 = vector.broadcast %5 : vector<1x64xf32> to vector<8x64xf32>
    %7 = arith.addf %4, %6 : vector<8x64xf32>
    %c0_6 = arith.constant 0 : index
    %c0_7 = arith.constant 0 : index
    %8 = vector.load %arg9[%c0_6, %c0_7] : memref<8x64xf32, #tpu.memory_space<vmem>>, vector<8x64xf32>
    tpu.vector_store %arg9[%c0_6, %c0_7], %7 {strides = array<i32>} : memref<8x64xf32, #tpu.memory_space<vmem>>, vector<8x64xf32>,
    %c0_8 = arith.constant 0 : index
    %c0_9 = arith.constant 0 : index
    %9 = vector.load %arg2[%c0_8, %c0_9] : memref<8x32xf32, #tpu.memory_space<vmem>>, vector<8x32xf32>
    %c1 = arith.constant 1 : index
    %c0_10 = arith.constant 0 : index
    %c0_11 = arith.constant 0 : index
    %10 = vector.load %arg4[%c1, %c0_10, %c0_11] : memref<3x32x64xf32, #tpu.memory_space<vmem>>, vector<1x32x64xf32>
    %11 = vector.shape_cast %10 : vector<1x32x64xf32> to vector<32x64xf32>
    %cst_12 = arith.constant dense<0.000000e+00> : vector<8x64xf32>
    %12 = tpu.matmul %9, %11, %cst_12 {dimension_numbers = #tpu.dot_dimension_numbers<[1], [0], [0], [1], [0, 0, 1, 1], [], []>} : vector<8x32xf32>, vector<32x64xf32>, vector<8x64xf32> -> vector<8x64xf32>
    %13 = vector.extract_strided_slice %0 {offsets = [1, 0], sizes = [1, 64], strides = [1, 1]} : vector<3x64xf32> to vector<1x64xf32>
    %14 = vector.broadcast %13 : vector<1x64xf32> to vector<8x64xf32>
    %15 = arith.addf %12, %14 : vector<8x64xf32>
    %c0_13 = arith.constant 0 : index
    %c0_14 = arith.constant 0 : index
    %16 = vector.load %arg10[%c0_13, %c0_14] : memref<8x64xf32, #tpu.memory_space<vmem>>, vector<8x64xf32>
    tpu.vector_store %arg10[%c0_13, %c0_14], %15 {strides = array<i32>} : memref<8x64xf32, #tpu.memory_space<vmem>>, vector<8x64xf32>,
    %c0_15 = arith.constant 0 : index
    %c0_16 = arith.constant 0 : index
    %17 = vector.load %arg3[%c0_15, %c0_16] : memref<8x32xf32, #tpu.memory_space<vmem>>, vector<8x32xf32>
    %c2 = arith.constant 2 : index
    %c0_17 = arith.constant 0 : index
    %c0_18 = arith.constant 0 : index
    %18 = vector.load %arg4[%c2, %c0_17, %c0_18] : memref<3x32x64xf32, #tpu.memory_space<vmem>>, vector<1x32x64xf32>
    %19 = vector.shape_cast %18 : vector<1x32x64xf32> to vector<32x64xf32>
    %cst_19 = arith.constant dense<0.000000e+00> : vector<8x64xf32>
    %20 = tpu.matmul %17, %19, %cst_19 {dimension_numbers = #tpu.dot_dimension_numbers<[1], [0], [0], [1], [0, 0, 1, 1], [], []>} : vector<8x32xf32>, vector<32x64xf32>, vector<8x64xf32> -> vector<8x64xf32>
    %21 = vector.extract_strided_slice %0 {offsets = [2, 0], sizes = [1, 64], strides = [1, 1]} : vector<3x64xf32> to vector<1x64xf32>
    %22 = vector.broadcast %21 : vector<1x64xf32> to vector<8x64xf32>
    %23 = arith.addf %20, %22 : vector<8x64xf32>
    %c0_20 = arith.constant 0 : index
    %c0_21 = arith.constant 0 : index
    %24 = vector.load %arg11[%c0_20, %c0_21] : memref<8x64xf32, #tpu.memory_space<vmem>>, vector<8x64xf32>
    tpu.vector_store %arg11[%c0_20, %c0_21], %23 {strides = array<i32>} : memref<8x64xf32, #tpu.memory_space<vmem>>, vector<8x64xf32>,
    %c3 = arith.constant 3 : index
    %c0_22 = arith.constant 0 : index
    %25 = vector.load %arg5[%c3, %c0_22] : memref<8x64xf32, #tpu.memory_space<vmem>>, vector<2x64xf32>
    %c5 = arith.constant 5 : index
    %c0_23 = arith.constant 0 : index
    %26 = vector.load %arg5[%c5, %c0_23] : memref<8x64xf32, #tpu.memory_space<vmem>>, vector<2x64xf32>
    %c7 = arith.constant 7 : index
    %c0_24 = arith.constant 0 : index
    %27 = vector.load %arg5[%c7, %c0_24] : memref<8x64xf32, #tpu.memory_space<vmem>>, vector<1x64xf32>
    %c0_25 = arith.constant 0 : index
    %c0_26 = arith.constant 0 : index
    %28 = vector.load %arg9[%c0_25, %c0_26] : memref<8x64xf32, #tpu.memory_space<vmem>>, vector<8x64xf32>
    %c0_27 = arith.constant 0 : index
    %c0_28 = arith.constant 0 : index
    %29 = vector.load %arg10[%c0_27, %c0_28] : memref<8x64xf32, #tpu.memory_space<vmem>>, vector<8x64xf32>
    %c0_29 = arith.constant 0 : index
    %c0_30 = arith.constant 0 : index
    %30 = vector.load %arg11[%c0_29, %c0_30] : memref<8x64xf32, #tpu.memory_space<vmem>>, vector<8x64xf32>
    %31 = vector.extract_strided_slice %25 {offsets = [0, 0], sizes = [1, 64], strides = [1, 1]} : vector<2x64xf32> to vector<1x64xf32>
    %32 = vector.broadcast %31 : vector<1x64xf32> to vector<8x64xf32>
    %33 = arith.mulf %28, %32 : vector<8x64xf32>
    %34 = vector.extract_strided_slice %25 {offsets = [1, 0], sizes = [1, 64], strides = [1, 1]} : vector<2x64xf32> to vector<1x64xf32>
    %35 = vector.broadcast %34 : vector<1x64xf32> to vector<8x64xf32>
    %36 = arith.mulf %28, %35 : vector<8x64xf32>
    %37 = tpu.concatenate %33, %36 in 0 : vector<8x64xf32>, vector<8x64xf32> -> vector<16x64xf32>
    %cst_31 = arith.constant dense<0.000000e+00> : vector<16x8xf32>
    %38 = tpu.matmul %37, %29, %cst_31 {dimension_numbers = #tpu.dot_dimension_numbers<[1], [1], [0], [0], [0, 0, 1, 0], [], []>} : vector<16x64xf32>, vector<8x64xf32>, vector<16x8xf32> -> vector<16x8xf32>
    %cst_32 = arith.constant dense<0xFF800000> : vector<16xf32>
    %39 = vector.multi_reduction <maximumf>, %38, %cst_32 [1] : vector<16x8xf32> to vector<16xf32>
    %40 = vector.shape_cast %39 : vector<16xf32> to vector<16x1xf32>
    %41 = vector.broadcast %40 : vector<16x1xf32> to vector<16x8xf32>
    %42 = arith.subf %38, %41 : vector<16x8xf32>
    %43 = math.exp %42 : vector<16x8xf32>
    %cst_33 = arith.constant dense<0.000000e+00> : vector<16xf32>
    %44 = vector.multi_reduction <add>, %43, %cst_33 [1] : vector<16x8xf32> to vector<16xf32>
    %45 = vector.shape_cast %44 : vector<16xf32> to vector<16x1xf32>
    %46 = tpu.reciprocal %45 {approx = true} : vector<16x1xf32> -> vector<16x1xf32>
    %47 = vector.broadcast %46 : vector<16x1xf32> to vector<16x8xf32>
    %48 = arith.mulf %43, %47 : vector<16x8xf32>
    %cst_34 = arith.constant dense<0.000000e+00> : vector<16x64xf32>
    %49 = tpu.matmul %48, %30, %cst_34 {dimension_numbers = #tpu.dot_dimension_numbers<[1], [0], [0], [1], [0, 0, 1, 1], [], []>} : vector<16x8xf32>, vector<8x64xf32>, vector<16x64xf32> -> vector<16x64xf32>
    %cst_35 = arith.constant dense<0.000000e+00> : vector<64xf32>
    %50 = vector.multi_reduction <add>, %30, %cst_35 [0] : vector<8x64xf32> to vector<64xf32>
    %51 = vector.shape_cast %50 : vector<64xf32> to vector<1x64xf32>
    %52 = arith.mulf %27, %51 : vector<1x64xf32>
    %53 = vector.extract_strided_slice %26 {offsets = [0, 0], sizes = [1, 64], strides = [1, 1]} : vector<2x64xf32> to vector<1x64xf32>
    %54 = vector.extract_strided_slice %49 {offsets = [0, 0], sizes = [8, 64], strides = [1, 1]} : vector<16x64xf32> to vector<8x64xf32>
    %55 = vector.broadcast %53 : vector<1x64xf32> to vector<8x64xf32>
    %56 = arith.mulf %55, %54 : vector<8x64xf32>
    %57 = vector.broadcast %52 : vector<1x64xf32> to vector<8x64xf32>
    %58 = arith.addf %57, %56 : vector<8x64xf32>
    %59 = vector.extract_strided_slice %26 {offsets = [1, 0], sizes = [1, 64], strides = [1, 1]} : vector<2x64xf32> to vector<1x64xf32>
    %60 = vector.extract_strided_slice %49 {offsets = [8, 0], sizes = [8, 64], strides = [1, 1]} : vector<16x64xf32> to vector<8x64xf32>
    %61 = vector.broadcast %59 : vector<1x64xf32> to vector<8x64xf32>
    %62 = arith.mulf %61, %60 : vector<8x64xf32>
    %63 = arith.addf %58, %62 : vector<8x64xf32>
    %c0_36 = arith.constant 0 : index
    %c0_37 = arith.constant 0 : index
    %64 = vector.load %arg12[%c0_36, %c0_37] : memref<8x64xf32, #tpu.memory_space<vmem>>, vector<8x64xf32>
    tpu.vector_store %arg12[%c0_36, %c0_37], %63 {strides = array<i32>} : memref<8x64xf32, #tpu.memory_space<vmem>>, vector<8x64xf32>,
    %c0_38 = arith.constant 0 : index
    %c0_39 = arith.constant 0 : index
    %65 = vector.load %arg12[%c0_38, %c0_39] : memref<8x64xf32, #tpu.memory_space<vmem>>, vector<8x64xf32>
    %c0_40 = arith.constant 0 : index
    %c0_41 = arith.constant 0 : index
    %66 = vector.load %arg6[%c0_40, %c0_41] : memref<64x32xf32, #tpu.memory_space<vmem>>, vector<64x32xf32>
    %cst_42 = arith.constant dense<0.000000e+00> : vector<8x32xf32>
    %67 = tpu.matmul %65, %66, %cst_42 {dimension_numbers = #tpu.dot_dimension_numbers<[1], [0], [0], [1], [0, 0, 1, 1], [], []>} : vector<8x64xf32>, vector<64x32xf32>, vector<8x32xf32> -> vector<8x32xf32>
    %c0_43 = arith.constant 0 : index
    %c0_44 = arith.constant 0 : index
    %68 = vector.load %arg7[%c0_43, %c0_44] : memref<1x32xf32, #tpu.memory_space<vmem>>, vector<1x32xf32>
    %69 = vector.broadcast %68 : vector<1x32xf32> to vector<8x32xf32>
    %70 = arith.addf %67, %69 : vector<8x32xf32>
    %c0_45 = arith.constant 0 : index
    %c0_46 = arith.constant 0 : index
    %71 = vector.load %arg8[%c0_45, %c0_46] : memref<8x32xf32, #tpu.memory_space<vmem>>, vector<8x32xf32>
    tpu.vector_store %arg8[%c0_45, %c0_46], %70 {strides = array<i32>} : memref<8x32xf32, #tpu.memory_space<vmem>>, vector<8x32xf32>,
    return
  }
  func.func @transform_0(%arg0: i32) -> (i32, i32) {
    %c0_i32 = arith.constant 0 : i32
    %c0_i32_0 = arith.constant 0 : i32
    return %arg0, %c0_i32 : i32, i32
  }
  func.func @transform_1(%arg0: i32) -> (i32, i32) {
    %c0_i32 = arith.constant 0 : i32
    %c0_i32_0 = arith.constant 0 : i32
    return %arg0, %c0_i32 : i32, i32
  }
  func.func @transform_2(%arg0: i32) -> (i32, i32) {
    %c0_i32 = arith.constant 0 : i32
    %c0_i32_0 = arith.constant 0 : i32
    return %arg0, %c0_i32 : i32, i32
  }
  func.func @transform_3(%arg0: i32) -> (i32, i32, i32) {
    %c0_i32 = arith.constant 0 : i32
    %c0_i32_0 = arith.constant 0 : i32
    %c0_i32_1 = arith.constant 0 : i32
    %c0_i32_2 = arith.constant 0 : i32
    return %c0_i32, %c0_i32_0, %c0_i32_1 : i32, i32, i32
  }
  func.func @transform_4(%arg0: i32) -> (i32, i32) {
    %c0_i32 = arith.constant 0 : i32
    %c0_i32_0 = arith.constant 0 : i32
    %c0_i32_1 = arith.constant 0 : i32
    return %c0_i32, %c0_i32_0 : i32, i32
  }
  func.func @transform_5(%arg0: i32) -> (i32, i32) {
    %c0_i32 = arith.constant 0 : i32
    %c0_i32_0 = arith.constant 0 : i32
    %c0_i32_1 = arith.constant 0 : i32
    return %c0_i32, %c0_i32_0 : i32, i32
  }
  func.func @transform_6(%arg0: i32) -> (i32, i32) {
    %c0_i32 = arith.constant 0 : i32
    %c0_i32_0 = arith.constant 0 : i32
    %c0_i32_1 = arith.constant 0 : i32
    return %c0_i32, %c0_i32_0 : i32, i32
  }
  func.func @transform_7(%arg0: i32) -> (i32, i32) {
    %c0_i32 = arith.constant 0 : i32
    %c0_i32_0 = arith.constant 0 : i32
    return %arg0, %c0_i32 : i32, i32
  }
}

</mosaic_0001>

<llo_original>
// kernel: tpu_custom_call.1
$region0: #{tpu_custom_call.1}
  #allocation0 [shape = 'u32[]', space=smem, size = 0x4, offset = 0x4, fixed_abs, tag = 'smem constant byte address 0x4 - core index']
  #allocation1 [shape = 'u32[144,128]{1,0:T(1,128)}', space=vmem, size = 0x12000, scoped, tag = 'internal scratch']
  #allocation2 [shape = 'f32[8,64]{1,0:T(8,128)}', space=vmem, size = 0x1000, scoped, tag = 'scratch operand']
  #allocation3 [shape = 'f32[8,64]{1,0:T(8,128)}', space=vmem, size = 0x1000, scoped, tag = 'scratch operand']
  #allocation4 [shape = 'f32[8,64]{1,0:T(8,128)}', space=vmem, size = 0x1000, scoped, tag = 'scratch operand']
  #allocation5 [shape = 'f32[8,64]{1,0:T(8,128)}', space=vmem, size = 0x1000, scoped, tag = 'scratch operand']
  %s0 = inlined_call_operand.hbm [shape: f32[16,32], index: 0, kind: input, shape index: {}]
  %s1 = inlined_call_operand.hbm [shape: f32[16,32], index: 1, kind: input, shape index: {}]
  %s2 = inlined_call_operand.hbm [shape: f32[16,32], index: 2, kind: input, shape index: {}]
  %s3 = inlined_call_operand.vmem [shape: f32[3,32,64], index: 3, kind: input, shape index: {}]
  %s4 = inlined_call_operand.vmem [shape: f32[8,64], index: 4, kind: input, shape index: {}]
  %s5 = inlined_call_operand.vmem [shape: f32[64,32], index: 5, kind: input, shape index: {}]
  %s6 = inlined_call_operand.vmem [shape: f32[1,32], index: 6, kind: input, shape index: {}]
  %s7 = inlined_call_operand.hbm [shape: f32[16,32], index: 7, kind: output, shape index: {}]
  %s8 = sld [smem:[#allocation0]]
  $region73: #{tpu_custom_call.1} parent=0
    _
  %s10 = ssub.s32 1, %s8
  %s11 = scalar_select 0, %s10, %s8
  $region1: #{tpu_custom_call.1} parent=0
    #allocation6 [shape = 'u8[8192]{0}', space=vmem, size = 0x2000, scoped, tag = 'input window, operand 0']
    #allocation7 [shape = 's32[2]{0}', space=sflag, size = 0x8, scoped, tag = 'scoped memory for tpu_custom_call.1']
    #allocation8 [shape = 's32[2]{0}', space=sflag, size = 0x8, scoped, tag = 'scoped memory for tpu_custom_call.1']
    #allocation9 [shape = 'u8[8192]{0}', space=vmem, size = 0x2000, scoped, tag = 'input window, operand 1']
    #allocation10 [shape = 's32[2]{0}', space=sflag, size = 0x8, scoped, tag = 'scoped memory for tpu_custom_call.1']
    #allocation11 [shape = 'u8[8192]{0}', space=vmem, size = 0x2000, scoped, tag = 'input window, operand 2']
    #allocation12 [shape = 'u8[8192]{0}', space=vmem, size = 0x2000, scoped, tag = 'output window, operand 0']
    %12 = vsyncpa [#allocation7], 0
    %s13 = scalar_lea.sflag [#allocation7], 1
    %14 = vsyncpa %s13, 0
    %15 = vsyncpa [#allocation10], 0
    %s16 = scalar_lea.sflag [#allocation10], 1
    %17 = vsyncpa %s16, 0
    %18 = vsyncpa [#allocation8], 0
    %s19 = scalar_lea.sflag [#allocation8], 1
    %20 = vsyncpa %s19, 0
    loop: start=0, step=1, limit=4
    $region2: #{tpu_custom_call.1} parent=1 // loop_pre_header
      _
    $region3: #{tpu_custom_call.1} parent=1 // loop_header
      %s22 = sphi 0, %s26
      %p23 = scmp.ge.s32.totalorder %s22, 4
      %s32 = sphi 0, %s34
      %s35 = sphi 0, %s32
      %s36 = sphi 0, %s35
      %s52 = sphi 0, %s36
      %s58 = sphi 0, %s60
      %s61 = sphi 0, %s58
      %s62 = sphi 0, %s61
      %s78 = sphi 0, %s62
      %s84 = sphi 0, %s86
      %s87 = sphi 0, %s84
      %s88 = sphi 0, %s87
      %s104 = sphi 0, %s88
      %s108 = sphi 0, %s108
      %s110 = sphi 0, %s108
      %s111 = sphi 0, %s110
      %s125 = sphi 0, %s111
      %s129 = sphi 0, %s129
      %s131 = sphi 0, %s129
      %s132 = sphi 0, %s131
      %s146 = sphi 0, %s132
      %s150 = sphi 0, %s150
      %s152 = sphi 0, %s150
      %s153 = sphi 0, %s152
      %s167 = sphi 0, %s153
      %s171 = sphi 0, %s171
      %s173 = sphi 0, %s171
      %s174 = sphi 0, %s173
      %s188 = sphi 0, %s174
      %s194 = sphi 0, %s196
      %s197 = sphi 0, %s194
      %s198 = sphi 0, %s197
      %s214 = sphi 0, %s198
    $region4: #{tpu_custom_call.1} parent=1 // loop_header_branch
      %25 = sbr.rel (%p23) target = $region8
    $region5: #{tpu_custom_call.1} parent=1 // loop_body
      %s27 = ssub.s32 %s22, 1
      %s28 = ssub.s32 %s22, 2
      %s29 = sadd.s32 %s22, 1
      %s30 = ssub.s32 %s22, %s29
      %p31 = scmp.eq.s32.totalorder %s30, 0
      %s33 = sadd.s32 %s32, 1
      %s34 = scalar_select %p31, %s32, %s33
      %p37 = pneg %p31
      %p38 = scmp.eq.s32.totalorder %s22, 1
      %p39 = por %p37, %p38
      %p40 = scmp.ne.s32.totalorder %s32, %s35
      %p41 = scmp.eq.s32.totalorder %s22, 0
      %p42 = por %p40, %p41
      %p43 = scmp.ne.s32.totalorder %s32, %s35
      %p44 = scmp.eq.s32.totalorder %s27, 1
      %p45 = por %p43, %p44
      %p46 = scmp.ne.s32.totalorder %s35, %s36
      %p47 = scmp.eq.s32.totalorder %s27, 0
      %p48 = por %p46, %p47
      %p49 = scmp.ne.s32.totalorder %s35, %s36
      %p50 = scmp.eq.s32.totalorder %s28, 1
      %p51 = por %p49, %p50
      %p53 = scmp.ne.s32.totalorder %s36, %s52
      %p54 = scmp.eq.s32.totalorder %s28, 0
      %p55 = por %p53, %p54
      %s56 = ssub.s32 %s22, %s29
      %p57 = scmp.eq.s32.totalorder %s56, 0
      %s59 = sadd.s32 %s58, 1
      %s60 = scalar_select %p57, %s58, %s59
      %p63 = pneg %p57
      %p64 = scmp.eq.s32.totalorder %s22, 1
      %p65 = por %p63, %p64
      %p66 = scmp.ne.s32.totalorder %s58, %s61
      %p67 = scmp.eq.s32.totalorder %s22, 0
      %p68 = por %p66, %p67
      %p69 = scmp.ne.s32.totalorder %s58, %s61
      %p70 = scmp.eq.s32.totalorder %s27, 1
      %p71 = por %p69, %p70
      %p72 = scmp.ne.s32.totalorder %s61, %s62
      %p73 = scmp.eq.s32.totalorder %s27, 0
      %p74 = por %p72, %p73
      %p75 = scmp.ne.s32.totalorder %s61, %s62
      %p76 = scmp.eq.s32.totalorder %s28, 1
      %p77 = por %p75, %p76
      %p79 = scmp.ne.s32.totalorder %s62, %s78
      %p80 = scmp.eq.s32.totalorder %s28, 0
      %p81 = por %p79, %p80
      %s82 = ssub.s32 %s22, %s29
      %p83 = scmp.eq.s32.totalorder %s82, 0
      %s85 = sadd.s32 %s84, 1
      %s86 = scalar_select %p83, %s84, %s85
      %p89 = pneg %p83
      %p90 = scmp.eq.s32.totalorder %s22, 1
      %p91 = por %p89, %p90
      %p92 = scmp.ne.s32.totalorder %s84, %s87
      %p93 = scmp.eq.s32.totalorder %s22, 0
      %p94 = por %p92, %p93
      %p95 = scmp.ne.s32.totalorder %s84, %s87
      %p96 = scmp.eq.s32.totalorder %s27, 1
      %p97 = por %p95, %p96
      %p98 = scmp.ne.s32.totalorder %s87, %s88
      %p99 = scmp.eq.s32.totalorder %s27, 0
      %p100 = por %p98, %p99
      %p101 = scmp.ne.s32.totalorder %s87, %s88
      %p102 = scmp.eq.s32.totalorder %s28, 1
      %p103 = por %p101, %p102
      %p105 = scmp.ne.s32.totalorder %s88, %s104
      %p106 = scmp.eq.s32.totalorder %s28, 0
      %p107 = por %p105, %p106
      %s109 = sadd.s32 %s108, 1
      %p112 = scmp.eq.s32.totalorder %s22, 1
      %p113 = scmp.ne.s32.totalorder %s108, %s110
      %p114 = scmp.eq.s32.totalorder %s22, 0
      %p115 = por %p113, %p114
      %p116 = scmp.ne.s32.totalorder %s108, %s110
      %p117 = scmp.eq.s32.totalorder %s27, 1
      %p118 = por %p116, %p117
      %p119 = scmp.ne.s32.totalorder %s110, %s111
      %p120 = scmp.eq.s32.totalorder %s27, 0
      %p121 = por %p119, %p120
      %p122 = scmp.ne.s32.totalorder %s110, %s111
      %p123 = scmp.eq.s32.totalorder %s28, 1
      %p124 = por %p122, %p123
      %p126 = scmp.ne.s32.totalorder %s111, %s125
      %p127 = scmp.eq.s32.totalorder %s28, 0
      %p128 = por %p126, %p127
      %s130 = sadd.s32 %s129, 1
      %p133 = scmp.eq.s32.totalorder %s22, 1
      %p134 = scmp.ne.s32.totalorder %s129, %s131
      %p135 = scmp.eq.s32.totalorder %s22, 0
      %p136 = por %p134, %p135
      %p137 = scmp.ne.s32.totalorder %s129, %s131
      %p138 = scmp.eq.s32.totalorder %s27, 1
      %p139 = por %p137, %p138
      %p140 = scmp.ne.s32.totalorder %s131, %s132
      %p141 = scmp.eq.s32.totalorder %s27, 0
      %p142 = por %p140, %p141
      %p143 = scmp.ne.s32.totalorder %s131, %s132
      %p144 = scmp.eq.s32.totalorder %s28, 1
      %p145 = por %p143, %p144
      %p147 = scmp.ne.s32.totalorder %s132, %s146
      %p148 = scmp.eq.s32.totalorder %s28, 0
      %p149 = por %p147, %p148
      %s151 = sadd.s32 %s150, 1
      %p154 = scmp.eq.s32.totalorder %s22, 1
      %p155 = scmp.ne.s32.totalorder %s150, %s152
      %p156 = scmp.eq.s32.totalorder %s22, 0
      %p157 = por %p155, %p156
      %p158 = scmp.ne.s32.totalorder %s150, %s152
      %p159 = scmp.eq.s32.totalorder %s27, 1
      %p160 = por %p158, %p159
      %p161 = scmp.ne.s32.totalorder %s152, %s153
      %p162 = scmp.eq.s32.totalorder %s27, 0
      %p163 = por %p161, %p162
      %p164 = scmp.ne.s32.totalorder %s152, %s153
      %p165 = scmp.eq.s32.totalorder %s28, 1
      %p166 = por %p164, %p165
      %p168 = scmp.ne.s32.totalorder %s153, %s167
      %p169 = scmp.eq.s32.totalorder %s28, 0
      %p170 = por %p168, %p169
      %s172 = sadd.s32 %s171, 1
      %p175 = scmp.eq.s32.totalorder %s22, 1
      %p176 = scmp.ne.s32.totalorder %s171, %s173
      %p177 = scmp.eq.s32.totalorder %s22, 0
      %p178 = por %p176, %p177
      %p179 = scmp.ne.s32.totalorder %s171, %s173
      %p180 = scmp.eq.s32.totalorder %s27, 1
      %p181 = por %p179, %p180
      %p182 = scmp.ne.s32.totalorder %s173, %s174
      %p183 = scmp.eq.s32.totalorder %s27, 0
      %p184 = por %p182, %p183
      %p185 = scmp.ne.s32.totalorder %s173, %s174
      %p186 = scmp.eq.s32.totalorder %s28, 1
      %p187 = por %p185, %p186
      %p189 = scmp.ne.s32.totalorder %s174, %s188
      %p190 = scmp.eq.s32.totalorder %s28, 0
      %p191 = por %p189, %p190
      %s192 = ssub.s32 %s22, %s29
      %p193 = scmp.eq.s32.totalorder %s192, 0
      %s195 = sadd.s32 %s194, 1
      %s196 = scalar_select %p193, %s194, %s195
      %p199 = pneg %p193
      %p200 = scmp.eq.s32.totalorder %s22, 1
      %p201 = por %p199, %p200
      %p202 = scmp.ne.s32.totalorder %s194, %s197
      %p203 = scmp.eq.s32.totalorder %s22, 0
      %p204 = por %p202, %p203
      %p205 = scmp.ne.s32.totalorder %s194, %s197
      %p206 = scmp.eq.s32.totalorder %s27, 1
      %p207 = por %p205, %p206
      %p208 = scmp.ne.s32.totalorder %s197, %s198
      %p209 = scmp.eq.s32.totalorder %s27, 0
      %p210 = por %p208, %p209
      %p211 = scmp.ne.s32.totalorder %s197, %s198
      %p212 = scmp.eq.s32.totalorder %s28, 1
      %p213 = por %p211, %p212
      %p215 = scmp.ne.s32.totalorder %s198, %s214
      %p216 = scmp.eq.s32.totalorder %s28, 0
      %p217 = por %p215, %p216
      %p218 = scmp.le.s32.totalorder 1, %s22
      %p219 = scmp.lt.s32.totalorder %s22, 3
      %p220 = pnand %p218, %p219
      %p221 = pneg %p220
      // Predicated region
      $region9: #{tpu_custom_call.1} parent=5 // pred_check
        _
      $region10: #{tpu_custom_call.1} parent=5 // pred_check_branch
        %223 = sbr.rel (%p220) target = $region12
      $region11: #{tpu_custom_call.1} parent=5 // pred_region
        %s224 = ssub.s32 %s22, 1
        // Predicated region
        $region13: #{tpu_custom_call.1} parent=11 // pred_check
          %p225 = pneg %p121
        $region14: #{tpu_custom_call.1} parent=11 // pred_check_branch
          %227 = sbr.rel (%p225) target = $region16
        $region15: #{tpu_custom_call.1} parent=11 // pred_region
          _
        $region16: #{tpu_custom_call.1} parent=11 // pred_fallthru
          _
        // Predicated region
        $region17: #{tpu_custom_call.1} parent=11 // pred_check
          %p228 = pneg %p142
        $region18: #{tpu_custom_call.1} parent=11 // pred_check_branch
          %230 = sbr.rel (%p228) target = $region20
        $region19: #{tpu_custom_call.1} parent=11 // pred_region
          _
        $region20: #{tpu_custom_call.1} parent=11 // pred_fallthru
          _
        // Predicated region
        $region21: #{tpu_custom_call.1} parent=11 // pred_check
          %p231 = pneg %p163
        $region22: #{tpu_custom_call.1} parent=11 // pred_check_branch
          %233 = sbr.rel (%p231) target = $region24
        $region23: #{tpu_custom_call.1} parent=11 // pred_region
          _
        $region24: #{tpu_custom_call.1} parent=11 // pred_fallthru
          _
        // Predicated region
        $region25: #{tpu_custom_call.1} parent=11 // pred_check
          %p234 = pneg %p184
        $region26: #{tpu_custom_call.1} parent=11 // pred_check_branch
          %236 = sbr.rel (%p234) target = $region28
        $region27: #{tpu_custom_call.1} parent=11 // pred_region
          _
        $region28: #{tpu_custom_call.1} parent=11 // pred_fallthru
          _
      $region12: #{tpu_custom_call.1} parent=5 // pred_fallthru
        _
      %p237 = scmp.lt.s32.totalorder %s22, 2
      // Predicated region
      $region29: #{tpu_custom_call.1} parent=5 // pred_check
        %p238 = pneg %p237
      $region30: #{tpu_custom_call.1} parent=5 // pred_check_branch
        %240 = sbr.rel (%p238) target = $region32
      $region31: #{tpu_custom_call.1} parent=5 // pred_region
        // Predicated region
        $region33: #{tpu_custom_call.1} parent=31 // pred_check
          %p241 = pneg %p42
        $region34: #{tpu_custom_call.1} parent=31 // pred_check_branch
          %243 = sbr.rel (%p241) target = $region36
        $region35: #{tpu_custom_call.1} parent=31 // pred_region
          %s244 = sand.u32 %s32, 1
          %s245 = scalar_lea.sflag [#allocation7], %s244
          %s246 = sand.u32 %s32, 1
          %s247 = smul.addr %s246, 8
          %s248 = scalar_lea.vmem [#allocation6], %s247
          %s250 = ssub.s32 128, 128
          %251 = vsyncadd %s245, %s250
          %s252 = smul.addr %s22, 128
          %s253 = scalar_lea.hbm %s0, %s252
          %s255 = sshll.u32 %s248, 4
          %s256 = int_to_ptr.vmem [resolvable:$true] %s255
          %258 = dma.hbm_to_vmem [thread:$0]  %s253, 128, %s256, %s245
        $region36: #{tpu_custom_call.1} parent=31 // pred_fallthru
          _
        // Predicated region
        $region37: #{tpu_custom_call.1} parent=31 // pred_check
          %p259 = pneg %p68
        $region38: #{tpu_custom_call.1} parent=31 // pred_check_branch
          %261 = sbr.rel (%p259) target = $region40
        $region39: #{tpu_custom_call.1} parent=31 // pred_region
          %s262 = sand.u32 %s22, 1
          %s263 = scalar_lea.sflag [#allocation10], %s262
          %s264 = sand.u32 %s58, 1
          %s265 = smul.addr %s264, 8
          %s266 = scalar_lea.vmem [#allocation9], %s265
          %s268 = ssub.s32 128, 128
          %269 = vsyncadd %s263, %s268
          %s270 = smul.addr %s22, 128
          %s271 = scalar_lea.hbm %s1, %s270
          %s273 = sshll.u32 %s266, 4
          %s274 = int_to_ptr.vmem [resolvable:$true] %s273
          %276 = dma.hbm_to_vmem [thread:$0]  %s271, 128, %s274, %s263
        $region40: #{tpu_custom_call.1} parent=31 // pred_fallthru
          _
        // Predicated region
        $region41: #{tpu_custom_call.1} parent=31 // pred_check
          %p277 = pneg %p94
        $region42: #{tpu_custom_call.1} parent=31 // pred_check_branch
          %279 = sbr.rel (%p277) target = $region44
        $region43: #{tpu_custom_call.1} parent=31 // pred_region
          %s280 = sand.u32 %s22, 1
          %s281 = scalar_lea.sflag [#allocation10], %s280
          %s282 = sand.u32 %s84, 1
          %s283 = smul.addr %s282, 8
          %s284 = scalar_lea.vmem [#allocation11], %s283
          %s286 = ssub.s32 128, 128
          %287 = vsyncadd %s281, %s286
          %s288 = smul.addr %s22, 128
          %s289 = scalar_lea.hbm %s2, %s288
          %s291 = sshll.u32 %s284, 4
          %s292 = int_to_ptr.vmem [resolvable:$true] %s291
          %294 = dma.hbm_to_vmem [thread:$0]  %s289, 128, %s292, %s281
        $region44: #{tpu_custom_call.1} parent=31 // pred_fallthru
          _
      $region32: #{tpu_custom_call.1} parent=5 // pred_fallthru
        _
      %p295 = scmp.le.s32.totalorder 1, %s22
      %p296 = scmp.lt.s32.totalorder %s22, 3
      %p297 = pnand %p295, %p296
      %p298 = pneg %p297
      // Predicated region
      $region45: #{tpu_custom_call.1} parent=5 // pred_check
        _
      $region46: #{tpu_custom_call.1} parent=5 // pred_check_branch
        %300 = sbr.rel (%p297) target = $region48
      $region47: #{tpu_custom_call.1} parent=5 // pred_region
        %s301 = ssub.s32 %s22, 1
        %s302 = sand.u32 %s35, 1
        %s303 = scalar_lea.sflag [#allocation7], %s302
        %s304 = sand.u32 %s35, 1
        %s305 = smul.addr %s304, 8
        %s306 = scalar_lea.vmem [#allocation6], %s305
        // Predicated region
        $region49: #{tpu_custom_call.1} parent=47 // pred_check
          %p307 = pneg %p48
        $region50: #{tpu_custom_call.1} parent=47 // pred_check_branch
          %309 = sbr.rel (%p307) target = $region52
        $region51: #{tpu_custom_call.1} parent=47 // pred_region
          %310 = dma.done %s303, 128
        $region52: #{tpu_custom_call.1} parent=47 // pred_fallthru
          _
        %s311 = sand.u32 %s27, 1
        %s312 = scalar_lea.sflag [#allocation10], %s311
        %s313 = sand.u32 %s61, 1
        %s314 = smul.addr %s313, 8
        %s315 = scalar_lea.vmem [#allocation9], %s314
        // Predicated region
        $region53: #{tpu_custom_call.1} parent=47 // pred_check
          %p316 = pneg %p74
        $region54: #{tpu_custom_call.1} parent=47 // pred_check_branch
          %318 = sbr.rel (%p316) target = $region56
        $region55: #{tpu_custom_call.1} parent=47 // pred_region
          %319 = dma.done %s312, 128
        $region56: #{tpu_custom_call.1} parent=47 // pred_fallthru
          _
        %s320 = sand.u32 %s27, 1
        %s321 = scalar_lea.sflag [#allocation10], %s320
        %s322 = sand.u32 %s87, 1
        %s323 = smul.addr %s322, 8
        %s324 = scalar_lea.vmem [#allocation11], %s323
        // Predicated region
        $region57: #{tpu_custom_call.1} parent=47 // pred_check
          %p325 = pneg %p100
        $region58: #{tpu_custom_call.1} parent=47 // pred_check_branch
          %327 = sbr.rel (%p325) target = $region60
        $region59: #{tpu_custom_call.1} parent=47 // pred_region
          %328 = dma.done %s321, 128
        $region60: #{tpu_custom_call.1} parent=47 // pred_fallthru
          _
        %s329 = sand.u32 %s35, 1
        %s330 = scalar_lea.sflag [#allocation7], %s329
        %s331 = sand.u32 %s35, 1
        %s332 = smul.addr %s331, 8
        %s333 = scalar_lea.vmem [#allocation6], %s332
        %p334 = pneg %p48
        %p335 = pneg %p45
        %s336 = sand.u32 %s27, 1
        %s337 = scalar_lea.sflag [#allocation10], %s336
        %s338 = sand.u32 %s61, 1
        %s339 = smul.addr %s338, 8
        %s340 = scalar_lea.vmem [#allocation9], %s339
        %p341 = pneg %p74
        %p342 = pneg %p71
        %s343 = sand.u32 %s27, 1
        %s344 = scalar_lea.sflag [#allocation10], %s343
        %s345 = sand.u32 %s87, 1
        %s346 = smul.addr %s345, 8
        %s347 = scalar_lea.vmem [#allocation11], %s346
        %p348 = pneg %p100
        %p349 = pneg %p97
        %p350 = pneg %p121
        %p351 = pneg %p118
        %p352 = pneg %p142
        %p353 = pneg %p139
        %p354 = pneg %p163
        %p355 = pneg %p160
        %p356 = pneg %p184
        %p357 = pneg %p181
        %p358 = pneg %p210
        %p359 = pneg %p207
        %s360 = sand.u32 %s197, 1
        %s361 = scalar_lea.sflag [#allocation8], %s360
        %s362 = sand.u32 %s197, 1
        %s363 = smul.addr %s362, 8
        %s364 = scalar_lea.vmem [#allocation12], %s363
        %v365 = vld [vmem:[%s4] sm:$0x7]
        %v366 = vld [vmem:[%s306] sm:$0xff]
        %v367 = vld [vmem:[%s3] sm:$0xff]
        %v368 = vld [vmem:[%s3 + $0x8] sm:$0xff]
        %v369 = vld [vmem:[%s3 + $0x10] sm:$0xff]
        %v370 = vld [vmem:[%s3 + $0x18] sm:$0xff]
        %v371 = vlaneseq
        %v372 = vshrl.u32 %v371, 7
        %v373 = vsub.s32 0, %v372
        %v374 = vrot.slane %v365, %v373
        %vm375 = vcmask 261120
        %v377 = vsel %vm375, %v366, 0
        %379 = vmatprep.subr.mxu0 0.0
        %380 = vmatpush1.msra.mxu0 %v367
        %381 = vmatprep.subr.mxu0 0.0
        %382 = vmatpush1.msra.mxu0 %v368
        %383 = vmatprep.subr.mxu0 0.0
        %384 = vmatpush1.msra.mxu0 %v369
        %385 = vmatprep.subr.mxu0 0.0
        %386 = vmatpush1.msra.mxu0 %v370
        %387 = vmatprep.subr.mxu0 0.0
        %388 = vmatpush1.msra.mxu0 0.0
        %389 = vmatprep.subr.mxu0 0.0
        %390 = vmatpush1.msra.mxu0 0.0
        %391 = vmatprep.subr.mxu0 0.0
        %392 = vmatpush1.msra.mxu0 0.0
        %393 = vmatprep.subr.mxu0 0.0
        %394 = vmatpush1.msra.mxu0 0.0
        %395 = vmatprep.subr.mxu0 0.0
        %396 = vmatpush1.msra.mxu0 0.0
        %397 = vmatprep.subr.mxu0 0.0
        %398 = vmatpush1.msra.mxu0 0.0
        %399 = vmatprep.subr.mxu0 0.0
        %400 = vmatpush1.msra.mxu0 0.0
        %401 = vmatprep.subr.mxu0 0.0
        %402 = vmatpush1.msra.mxu0 0.0
        %403 = vmatprep.subr.mxu0 0.0
        %404 = vmatpush1.msra.mxu0 0.0
        %405 = vmatprep.subr.mxu0 0.0
        %406 = vmatpush1.msra.mxu0 0.0
        %407 = vmatprep.subr.mxu0 0.0
        %408 = vmatpush1.msra.mxu0 0.0
        %409 = vmatprep.subr.mxu0 0.0
        %410 = vmatpush1.msra.mxu0 0.0
        %411 = vmatprep.subr.mxu0 0.0
        %412 = vmatpush1.msra.mxu0 0.0
        %413 = vmatprep.subr.mxu0 0.0
        %414 = vmatpush1.msra.mxu0 0.0
        %415 = vmatprep.subr.mxu0 0.0
        %416 = vmatpush1.msra.mxu0 0.0
        %417 = vmatprep.subr.mxu0 0.0
        %418 = vmatpush1.msra.mxu0 0.0
        %419 = vmatprep.subr.mxu0 0.0
        %420 = vmatpush1.msra.mxu0 0.0
        %421 = vmatprep.subr.mxu0 0.0
        %422 = vmatpush1.msra.mxu0 0.0
        %423 = vmatprep.subr.mxu0 0.0
        %424 = vmatpush1.msra.mxu0 0.0
        %425 = vmatprep.subr.mxu0 0.0
        %426 = vmatpush1.msra.mxu0 0.0
        %427 = vmatprep.subr.mxu0 0.0
        %428 = vmatpush1.msra.mxu0 0.0
        %429 = vmatprep.subr.mxu0 0.0
        %430 = vmatpush1.msra.mxu0 0.0
        %431 = vmatprep.subr.mxu0 0.0
        %432 = vmatpush1.msra.mxu0 0.0
        %433 = vmatprep.subr.mxu0 0.0
        %434 = vmatpush1.msra.mxu0 0.0
        %435 = vmatprep.subr.mxu0 0.0
        %436 = vmatpush1.msra.mxu0 0.0
        %437 = vmatprep.subr.mxu0 0.0
        %438 = vmatpush1.msra.mxu0 0.0
        %439 = vmatprep.subr.mxu0 0.0
        %440 = vmatpush1.msra.mxu0 0.0
        %441 = vmatprep.subr.mxu0 0.0
        %442 = vmatpush1.msra.mxu0 0.0
        %443 = vmatprep.mubr.f32.mxu0 0.0
        %444 = vmatmul.mubr.f32.gmra.mrb[0].mxu0 %v377
        %v445 = vpop.f32.mrb[0].mxu0
        %v446 = vadd.f32 %v374, %v445
        %v447 = vpop.f32.mrb[0].mxu0
        %448 = vdwg.mxu0
        %vm449 = vcmask 523264
        %450 = vst.msk [vmem:[#allocation2] sm:$0xff] %vm449, %v446
        %v451 = vld [vmem:[%s315] sm:$0xff]
        %s452 = scalar_lea.vmem %s3, 32
        %v453 = vld [vmem:[%s452] sm:$0xff]
        %v454 = vld [vmem:[%s452 + $0x8] sm:$0xff]
        %v455 = vld [vmem:[%s452 + $0x10] sm:$0xff]
        %v456 = vld [vmem:[%s452 + $0x18] sm:$0xff]
        %v457 = vlaneseq
        %v458 = vshrl.u32 %v457, 7
        %v459 = vsub.s32 1, %v458
        %v460 = vrot.slane %v365, %v459
        %v462 = vsel %vm375, %v451, 0
        %464 = vmatprep.subr.mxu0 0.0
        %465 = vmatpush1.msra.mxu0 %v453
        %466 = vmatprep.subr.mxu0 0.0
        %467 = vmatpush1.msra.mxu0 %v454
        %468 = vmatprep.subr.mxu0 0.0
        %469 = vmatpush1.msra.mxu0 %v455
        %470 = vmatprep.subr.mxu0 0.0
        %471 = vmatpush1.msra.mxu0 %v456
        %472 = vmatprep.subr.mxu0 0.0
        %473 = vmatpush1.msra.mxu0 0.0
        %474 = vmatprep.subr.mxu0 0.0
        %475 = vmatpush1.msra.mxu0 0.0
        %476 = vmatprep.subr.mxu0 0.0
        %477 = vmatpush1.msra.mxu0 0.0
        %478 = vmatprep.subr.mxu0 0.0
        %479 = vmatpush1.msra.mxu0 0.0
        %480 = vmatprep.subr.mxu0 0.0
        %481 = vmatpush1.msra.mxu0 0.0
        %482 = vmatprep.subr.mxu0 0.0
        %483 = vmatpush1.msra.mxu0 0.0
        %484 = vmatprep.subr.mxu0 0.0
        %485 = vmatpush1.msra.mxu0 0.0
        %486 = vmatprep.subr.mxu0 0.0
        %487 = vmatpush1.msra.mxu0 0.0
        %488 = vmatprep.subr.mxu0 0.0
        %489 = vmatpush1.msra.mxu0 0.0
        %490 = vmatprep.subr.mxu0 0.0
        %491 = vmatpush1.msra.mxu0 0.0
        %492 = vmatprep.subr.mxu0 0.0
        %493 = vmatpush1.msra.mxu0 0.0
        %494 = vmatprep.subr.mxu0 0.0
        %495 = vmatpush1.msra.mxu0 0.0
        %496 = vmatprep.subr.mxu0 0.0
        %497 = vmatpush1.msra.mxu0 0.0
        %498 = vmatprep.subr.mxu0 0.0
        %499 = vmatpush1.msra.mxu0 0.0
        %500 = vmatprep.subr.mxu0 0.0
        %501 = vmatpush1.msra.mxu0 0.0
        %502 = vmatprep.subr.mxu0 0.0
        %503 = vmatpush1.msra.mxu0 0.0
        %504 = vmatprep.subr.mxu0 0.0
        %505 = vmatpush1.msra.mxu0 0.0
        %506 = vmatprep.subr.mxu0 0.0
        %507 = vmatpush1.msra.mxu0 0.0
        %508 = vmatprep.subr.mxu0 0.0
        %509 = vmatpush1.msra.mxu0 0.0
        %510 = vmatprep.subr.mxu0 0.0
        %511 = vmatpush1.msra.mxu0 0.0
        %512 = vmatprep.subr.mxu0 0.0
        %513 = vmatpush1.msra.mxu0 0.0
        %514 = vmatprep.subr.mxu0 0.0
        %515 = vmatpush1.msra.mxu0 0.0
        %516 = vmatprep.subr.mxu0 0.0
        %517 = vmatpush1.msra.mxu0 0.0
        %518 = vmatprep.subr.mxu0 0.0
        %519 = vmatpush1.msra.mxu0 0.0
        %520 = vmatprep.subr.mxu0 0.0
        %521 = vmatpush1.msra.mxu0 0.0
        %522 = vmatprep.subr.mxu0 0.0
        %523 = vmatpush1.msra.mxu0 0.0
        %524 = vmatprep.subr.mxu0 0.0
        %525 = vmatpush1.msra.mxu0 0.0
        %526 = vmatprep.subr.mxu0 0.0
        %527 = vmatpush1.msra.mxu0 0.0
        %528 = vmatprep.mubr.f32.mxu0 0.0
        %529 = vmatmul.mubr.f32.gmra.mrb[0].mxu0 %v462
        %v530 = vpop.f32.mrb[0].mxu0
        %v531 = vadd.f32 %v460, %v530
        %v532 = vpop.f32.mrb[0].mxu0
        %533 = vdwg.mxu0
        %534 = vst.msk [vmem:[#allocation3] sm:$0xff] %vm449, %v531
        %v535 = vld [vmem:[%s324] sm:$0xff]
        %s536 = scalar_lea.vmem %s3, 64
        %v537 = vld [vmem:[%s536] sm:$0xff]
        %v538 = vld [vmem:[%s536 + $0x8] sm:$0xff]
        %v539 = vld [vmem:[%s536 + $0x10] sm:$0xff]
        %v540 = vld [vmem:[%s536 + $0x18] sm:$0xff]
        %v541 = vlaneseq
        %v542 = vshrl.u32 %v541, 7
        %v543 = vsub.s32 2, %v542
        %v544 = vrot.slane %v365, %v543
        %v546 = vsel %vm375, %v535, 0
        %548 = vmatprep.subr.mxu0 0.0
        %549 = vmatpush1.msra.mxu0 %v537
        %550 = vmatprep.subr.mxu0 0.0
        %551 = vmatpush1.msra.mxu0 %v538
        %552 = vmatprep.subr.mxu0 0.0
        %553 = vmatpush1.msra.mxu0 %v539
        %554 = vmatprep.subr.mxu0 0.0
        %555 = vmatpush1.msra.mxu0 %v540
        %556 = vmatprep.subr.mxu0 0.0
        %557 = vmatpush1.msra.mxu0 0.0
        %558 = vmatprep.subr.mxu0 0.0
        %559 = vmatpush1.msra.mxu0 0.0
        %560 = vmatprep.subr.mxu0 0.0
        %561 = vmatpush1.msra.mxu0 0.0
        %562 = vmatprep.subr.mxu0 0.0
        %563 = vmatpush1.msra.mxu0 0.0
        %564 = vmatprep.subr.mxu0 0.0
        %565 = vmatpush1.msra.mxu0 0.0
        %566 = vmatprep.subr.mxu0 0.0
        %567 = vmatpush1.msra.mxu0 0.0
        %568 = vmatprep.subr.mxu0 0.0
        %569 = vmatpush1.msra.mxu0 0.0
        %570 = vmatprep.subr.mxu0 0.0
        %571 = vmatpush1.msra.mxu0 0.0
        %572 = vmatprep.subr.mxu0 0.0
        %573 = vmatpush1.msra.mxu0 0.0
        %574 = vmatprep.subr.mxu0 0.0
        %575 = vmatpush1.msra.mxu0 0.0
        %576 = vmatprep.subr.mxu0 0.0
        %577 = vmatpush1.msra.mxu0 0.0
        %578 = vmatprep.subr.mxu0 0.0
        %579 = vmatpush1.msra.mxu0 0.0
        %580 = vmatprep.subr.mxu0 0.0
        %581 = vmatpush1.msra.mxu0 0.0
        %582 = vmatprep.subr.mxu0 0.0
        %583 = vmatpush1.msra.mxu0 0.0
        %584 = vmatprep.subr.mxu0 0.0
        %585 = vmatpush1.msra.mxu0 0.0
        %586 = vmatprep.subr.mxu0 0.0
        %587 = vmatpush1.msra.mxu0 0.0
        %588 = vmatprep.subr.mxu0 0.0
        %589 = vmatpush1.msra.mxu0 0.0
        %590 = vmatprep.subr.mxu0 0.0
        %591 = vmatpush1.msra.mxu0 0.0
        %592 = vmatprep.subr.mxu0 0.0
        %593 = vmatpush1.msra.mxu0 0.0
        %594 = vmatprep.subr.mxu0 0.0
        %595 = vmatpush1.msra.mxu0 0.0
        %596 = vmatprep.subr.mxu0 0.0
        %597 = vmatpush1.msra.mxu0 0.0
        %598 = vmatprep.subr.mxu0 0.0
        %599 = vmatpush1.msra.mxu0 0.0
        %600 = vmatprep.subr.mxu0 0.0
        %601 = vmatpush1.msra.mxu0 0.0
        %602 = vmatprep.subr.mxu0 0.0
        %603 = vmatpush1.msra.mxu0 0.0
        %604 = vmatprep.subr.mxu0 0.0
        %605 = vmatpush1.msra.mxu0 0.0
        %606 = vmatprep.subr.mxu0 0.0
        %607 = vmatpush1.msra.mxu0 0.0
        %608 = vmatprep.subr.mxu0 0.0
        %609 = vmatpush1.msra.mxu0 0.0
        %610 = vmatprep.subr.mxu0 0.0
        %611 = vmatpush1.msra.mxu0 0.0
        %612 = vmatprep.mubr.f32.mxu0 0.0
        %613 = vmatmul.mubr.f32.gmra.mrb[0].mxu0 %v546
        %v614 = vpop.f32.mrb[0].mxu0
        %v615 = vadd.f32 %v544, %v614
        %v616 = vpop.f32.mrb[0].mxu0
        %617 = vdwg.mxu0
        %618 = vst.msk [vmem:[#allocation4] sm:$0xff] %vm449, %v615
        %v619 = vld [vmem:[%s4 + $0x3] sm:$0x3]
        %v620 = vld [vmem:[%s4 + $0x5] sm:$0x3]
        %v621 = vld [vmem:[%s4 + $0x7] sm:$0x1]
        %v622 = vld [vmem:[#allocation2] sm:$0xff]
        %v623 = vld [vmem:[#allocation3] sm:$0xff]
        %v624 = vld [vmem:[#allocation4] sm:$0xff]
        %v625 = vlaneseq
        %v626 = vshrl.u32 %v625, 7
        %v627 = vsub.s32 0, %v626
        %v628 = vrot.slane %v619, %v627
        %v629 = vmul.f32 %v622, %v628
        %v630 = vlaneseq
        %v631 = vshrl.u32 %v630, 7
        %v632 = vsub.s32 1, %v631
        %v633 = vrot.slane %v619, %v632
        %v634 = vmul.f32 %v622, %v633
        %v636 = vsel %vm449, %v629, 0
        %v639 = vsel %vm449, %v634, 0
        %v642 = vsel %vm449, %v623, 0
        %644 = vmatprep.subr.mxu0 0.0
        %645 = vmatpush1.xpose.msra.mxu0 %v642
        %646 = vmatprep.subr.mxu0 0.0
        %647 = vmatpush1.xpose.msra.mxu0 0.0
        %648 = vmatprep.subr.mxu0 0.0
        %649 = vmatpush1.xpose.msra.mxu0 0.0
        %650 = vmatprep.subr.mxu0 0.0
        %651 = vmatpush1.xpose.msra.mxu0 0.0
        %652 = vmatprep.subr.mxu0 0.0
        %653 = vmatpush1.xpose.msra.mxu0 0.0
        %654 = vmatprep.subr.mxu0 0.0
        %655 = vmatpush1.xpose.msra.mxu0 0.0
        %656 = vmatprep.subr.mxu0 0.0
        %657 = vmatpush1.xpose.msra.mxu0 0.0
        %658 = vmatprep.subr.mxu0 0.0
        %659 = vmatpush1.xpose.msra.mxu0 0.0
        %660 = vmatprep.subr.mxu0 0.0
        %661 = vmatpush1.xpose.msra.mxu0 0.0
        %662 = vmatprep.subr.mxu0 0.0
        %663 = vmatpush1.xpose.msra.mxu0 0.0
        %664 = vmatprep.subr.mxu0 0.0
        %665 = vmatpush1.xpose.msra.mxu0 0.0
        %666 = vmatprep.subr.mxu0 0.0
        %667 = vmatpush1.xpose.msra.mxu0 0.0
        %668 = vmatprep.subr.mxu0 0.0
        %669 = vmatpush1.xpose.msra.mxu0 0.0
        %670 = vmatprep.subr.mxu0 0.0
        %671 = vmatpush1.xpose.msra.mxu0 0.0
        %672 = vmatprep.subr.mxu0 0.0
        %673 = vmatpush1.xpose.msra.mxu0 0.0
        %674 = vmatprep.subr.mxu0 0.0
        %675 = vmatpush1.xpose.msra.mxu0 0.0
        %676 = vmatprep.subr.mxu0 0.0
        %677 = vmatpush1.xpose.msra.mxu0 0.0
        %678 = vmatprep.subr.mxu0 0.0
        %679 = vmatpush1.xpose.msra.mxu0 0.0
        %680 = vmatprep.subr.mxu0 0.0
        %681 = vmatpush1.xpose.msra.mxu0 0.0
        %682 = vmatprep.subr.mxu0 0.0
        %683 = vmatpush1.xpose.msra.mxu0 0.0
        %684 = vmatprep.subr.mxu0 0.0
        %685 = vmatpush1.xpose.msra.mxu0 0.0
        %686 = vmatprep.subr.mxu0 0.0
        %687 = vmatpush1.xpose.msra.mxu0 0.0
        %688 = vmatprep.subr.mxu0 0.0
        %689 = vmatpush1.xpose.msra.mxu0 0.0
        %690 = vmatprep.subr.mxu0 0.0
        %691 = vmatpush1.xpose.msra.mxu0 0.0
        %692 = vmatprep.subr.mxu0 0.0
        %693 = vmatpush1.xpose.msra.mxu0 0.0
        %694 = vmatprep.subr.mxu0 0.0
        %695 = vmatpush1.xpose.msra.mxu0 0.0
        %696 = vmatprep.subr.mxu0 0.0
        %697 = vmatpush1.xpose.msra.mxu0 0.0
        %698 = vmatprep.subr.mxu0 0.0
        %699 = vmatpush1.xpose.msra.mxu0 0.0
        %700 = vmatprep.subr.mxu0 0.0
        %701 = vmatpush1.xpose.msra.mxu0 0.0
        %702 = vmatprep.subr.mxu0 0.0
        %703 = vmatpush1.xpose.msra.mxu0 0.0
        %704 = vmatprep.subr.mxu0 0.0
        %705 = vmatpush1.xpose.msra.mxu0 0.0
        %706 = vmatprep.subr.mxu0 0.0
        %707 = vmatpush1.xpose.msra.mxu0 0.0
        %708 = vmatprep.mubr.f32.mxu0 0.0
        %709 = vmatmul.mubr.f32.gmra.mrb[0].mxu0 %v636
        %v710 = vpop.f32.mrb[0].mxu0
        %v711 = vadd.f32 0.0, %v710
        %v712 = vpop.f32.mrb[0].mxu0
        %713 = vmatprep.mubr.f32.mxu0 0.0
        %714 = vmatmul.mubr.f32.gmra.mrb[0].mxu0 %v639
        %v715 = vpop.f32.mrb[0].mxu0
        %v716 = vadd.f32 0.0, %v715
        %v717 = vpop.f32.mrb[0].mxu0
        %718 = vdwg.mxu0
        %vm719 = vcmask 64512
        %v720 = vsel %vm719, %v711, -inf
        %721 = vmax.xlane.f32.xlu0 %v720
        %v722 = vpop.xlane.xlu0 %721
        %v723 = vsel %vm719, %v716, -inf
        %724 = vmax.xlane.f32.xlu0 %v723
        %v725 = vpop.xlane.xlu0 %724
        %v726 = vsub.f32 %v711, %v722
        %v727 = vsub.f32 %v716, %v725
        %v728 = vmul.f32 %v726, 1.442695
        %v729 = vpow.pop %v728
        %v730 = vmul.f32 %v727, 1.442695
        %v731 = vpow.pop %v730
        %v732 = vsel %vm719, %v729, 0.0
        %733 = vadd.xlane.f32.xlu0 %v732
        %v734 = vpop.xlane.xlu0 %733
        %v735 = vsel %vm719, %v731, 0.0
        %736 = vadd.xlane.f32.xlu0 %v735
        %v737 = vpop.xlane.xlu0 %736
        %v738 = vrcp.pop %v734
        %v739 = vrcp.pop %v737
        %v740 = vmul.f32 %v729, %v738
        %v741 = vmul.f32 %v731, %v739
        %v743 = vsel %vm719, %v740, 0
        %v746 = vsel %vm719, %v741, 0
        %748 = vmatprep.subr.mxu0 0.0
        %749 = vmatpush1.msra.mxu0 %v624
        %750 = vmatprep.subr.mxu0 0.0
        %751 = vmatpush1.msra.mxu0 0.0
        %752 = vmatprep.subr.mxu0 0.0
        %753 = vmatpush1.msra.mxu0 0.0
        %754 = vmatprep.subr.mxu0 0.0
        %755 = vmatpush1.msra.mxu0 0.0
        %756 = vmatprep.subr.mxu0 0.0
        %757 = vmatpush1.msra.mxu0 0.0
        %758 = vmatprep.subr.mxu0 0.0
        %759 = vmatpush1.msra.mxu0 0.0
        %760 = vmatprep.subr.mxu0 0.0
        %761 = vmatpush1.msra.mxu0 0.0
        %762 = vmatprep.subr.mxu0 0.0
        %763 = vmatpush1.msra.mxu0 0.0
        %764 = vmatprep.subr.mxu0 0.0
        %765 = vmatpush1.msra.mxu0 0.0
        %766 = vmatprep.subr.mxu0 0.0
        %767 = vmatpush1.msra.mxu0 0.0
        %768 = vmatprep.subr.mxu0 0.0
        %769 = vmatpush1.msra.mxu0 0.0
        %770 = vmatprep.subr.mxu0 0.0
        %771 = vmatpush1.msra.mxu0 0.0
        %772 = vmatprep.subr.mxu0 0.0
        %773 = vmatpush1.msra.mxu0 0.0
        %774 = vmatprep.subr.mxu0 0.0
        %775 = vmatpush1.msra.mxu0 0.0
        %776 = vmatprep.subr.mxu0 0.0
        %777 = vmatpush1.msra.mxu0 0.0
        %778 = vmatprep.subr.mxu0 0.0
        %779 = vmatpush1.msra.mxu0 0.0
        %780 = vmatprep.subr.mxu0 0.0
        %781 = vmatpush1.msra.mxu0 0.0
        %782 = vmatprep.subr.mxu0 0.0
        %783 = vmatpush1.msra.mxu0 0.0
        %784 = vmatprep.subr.mxu0 0.0
        %785 = vmatpush1.msra.mxu0 0.0
        %786 = vmatprep.subr.mxu0 0.0
        %787 = vmatpush1.msra.mxu0 0.0
        %788 = vmatprep.subr.mxu0 0.0
        %789 = vmatpush1.msra.mxu0 0.0
        %790 = vmatprep.subr.mxu0 0.0
        %791 = vmatpush1.msra.mxu0 0.0
        %792 = vmatprep.subr.mxu0 0.0
        %793 = vmatpush1.msra.mxu0 0.0
        %794 = vmatprep.subr.mxu0 0.0
        %795 = vmatpush1.msra.mxu0 0.0
        %796 = vmatprep.subr.mxu0 0.0
        %797 = vmatpush1.msra.mxu0 0.0
        %798 = vmatprep.subr.mxu0 0.0
        %799 = vmatpush1.msra.mxu0 0.0
        %800 = vmatprep.subr.mxu0 0.0
        %801 = vmatpush1.msra.mxu0 0.0
        %802 = vmatprep.subr.mxu0 0.0
        %803 = vmatpush1.msra.mxu0 0.0
        %804 = vmatprep.subr.mxu0 0.0
        %805 = vmatpush1.msra.mxu0 0.0
        %806 = vmatprep.subr.mxu0 0.0
        %807 = vmatpush1.msra.mxu0 0.0
        %808 = vmatprep.subr.mxu0 0.0
        %809 = vmatpush1.msra.mxu0 0.0
        %810 = vmatprep.subr.mxu0 0.0
        %811 = vmatpush1.msra.mxu0 0.0
        %812 = vmatprep.mubr.f32.mxu0 0.0
        %813 = vmatmul.mubr.f32.gmra.mrb[0].mxu0 %v743
        %v814 = vpop.f32.mrb[0].mxu0
        %v815 = vadd.f32 0.0, %v814
        %v816 = vpop.f32.mrb[0].mxu0
        %817 = vmatprep.mubr.f32.mxu0 0.0
        %818 = vmatmul.mubr.f32.gmra.mrb[0].mxu0 %v746
        %v819 = vpop.f32.mrb[0].mxu0
        %v820 = vadd.f32 0.0, %v819
        %v821 = vpop.f32.mrb[0].mxu0
        %822 = vdwg.mxu0
        %v823 = vsel %vm449, %v624, 0.0
        %v824 = vrot.slane %v823, 4
        %v825 = vadd.f32 %v823, %v824
        %v826 = vrot.slane %v825, 2
        %v827 = vadd.f32 %v825, %v826
        %v828 = vrot.slane %v827, 1
        %v829 = vadd.f32 %v827, %v828
        %v830 = vmul.f32 %v621, %v829
        %v831 = vlaneseq
        %v832 = vshrl.u32 %v831, 7
        %v833 = vsub.s32 0, %v832
        %v834 = vrot.slane %v620, %v833
        %v835 = vmul.f32 %v834, %v815
        %v836 = vlaneseq
        %v837 = vshrl.u32 %v836, 7
        %v838 = vsub.s32 0, %v837
        %v839 = vrot.slane %v830, %v838
        %v840 = vadd.f32 %v839, %v835
        %v841 = vlaneseq
        %v842 = vshrl.u32 %v841, 7
        %v843 = vsub.s32 1, %v842
        %v844 = vrot.slane %v620, %v843
        %v845 = vmul.f32 %v844, %v820
        %v846 = vadd.f32 %v840, %v845
        %847 = vst.msk [vmem:[#allocation5] sm:$0xff] %vm449, %v846
        %v848 = vld [vmem:[#allocation5] sm:$0xff]
        %v849 = vld [vmem:[%s5] sm:$0xff]
        %v850 = vld [vmem:[%s5 + $0x8] sm:$0xff]
        %v851 = vld [vmem:[%s5 + $0x10] sm:$0xff]
        %v852 = vld [vmem:[%s5 + $0x18] sm:$0xff]
        %v853 = vld [vmem:[%s5 + $0x20] sm:$0xff]
        %v854 = vld [vmem:[%s5 + $0x28] sm:$0xff]
        %v855 = vld [vmem:[%s5 + $0x30] sm:$0xff]
        %v856 = vld [vmem:[%s5 + $0x38] sm:$0xff]
        %v857 = vld [vmem:[%s6] sm:$0x1]
        %v859 = vlaneseq
        %v860 = vshrl.u32 %v859, 7
        %v861 = vsub.s32 0, %v860
        %v862 = vrot.slane %v857, %v861
        %v865 = vsel %vm449, %v848, 0
        %867 = vmatprep.subr.mxu0 0.0
        %868 = vmatpush1.msra.mxu0 %v849
        %869 = vmatprep.subr.mxu0 0.0
        %870 = vmatpush1.msra.mxu0 %v850
        %871 = vmatprep.subr.mxu0 0.0
        %872 = vmatpush1.msra.mxu0 %v851
        %873 = vmatprep.subr.mxu0 0.0
        %874 = vmatpush1.msra.mxu0 %v852
        %875 = vmatprep.subr.mxu0 0.0
        %876 = vmatpush1.msra.mxu0 %v853
        %877 = vmatprep.subr.mxu0 0.0
        %878 = vmatpush1.msra.mxu0 %v854
        %879 = vmatprep.subr.mxu0 0.0
        %880 = vmatpush1.msra.mxu0 %v855
        %881 = vmatprep.subr.mxu0 0.0
        %882 = vmatpush1.msra.mxu0 %v856
        %883 = vmatprep.subr.mxu0 0.0
        %884 = vmatpush1.msra.mxu0 0.0
        %885 = vmatprep.subr.mxu0 0.0
        %886 = vmatpush1.msra.mxu0 0.0
        %887 = vmatprep.subr.mxu0 0.0
        %888 = vmatpush1.msra.mxu0 0.0
        %889 = vmatprep.subr.mxu0 0.0
        %890 = vmatpush1.msra.mxu0 0.0
        %891 = vmatprep.subr.mxu0 0.0
        %892 = vmatpush1.msra.mxu0 0.0
        %893 = vmatprep.subr.mxu0 0.0
        %894 = vmatpush1.msra.mxu0 0.0
        %895 = vmatprep.subr.mxu0 0.0
        %896 = vmatpush1.msra.mxu0 0.0
        %897 = vmatprep.subr.mxu0 0.0
        %898 = vmatpush1.msra.mxu0 0.0
        %899 = vmatprep.subr.mxu0 0.0
        %900 = vmatpush1.msra.mxu0 0.0
        %901 = vmatprep.subr.mxu0 0.0
        %902 = vmatpush1.msra.mxu0 0.0
        %903 = vmatprep.subr.mxu0 0.0
        %904 = vmatpush1.msra.mxu0 0.0
        %905 = vmatprep.subr.mxu0 0.0
        %906 = vmatpush1.msra.mxu0 0.0
        %907 = vmatprep.subr.mxu0 0.0
        %908 = vmatpush1.msra.mxu0 0.0
        %909 = vmatprep.subr.mxu0 0.0
        %910 = vmatpush1.msra.mxu0 0.0
        %911 = vmatprep.subr.mxu0 0.0
        %912 = vmatpush1.msra.mxu0 0.0
        %913 = vmatprep.subr.mxu0 0.0
        %914 = vmatpush1.msra.mxu0 0.0
        %915 = vmatprep.subr.mxu0 0.0
        %916 = vmatpush1.msra.mxu0 0.0
        %917 = vmatprep.subr.mxu0 0.0
        %918 = vmatpush1.msra.mxu0 0.0
        %919 = vmatprep.subr.mxu0 0.0
        %920 = vmatpush1.msra.mxu0 0.0
        %921 = vmatprep.subr.mxu0 0.0
        %922 = vmatpush1.msra.mxu0 0.0
        %923 = vmatprep.subr.mxu0 0.0
        %924 = vmatpush1.msra.mxu0 0.0
        %925 = vmatprep.subr.mxu0 0.0
        %926 = vmatpush1.msra.mxu0 0.0
        %927 = vmatprep.subr.mxu0 0.0
        %928 = vmatpush1.msra.mxu0 0.0
        %929 = vmatprep.subr.mxu0 0.0
        %930 = vmatpush1.msra.mxu0 0.0
        %931 = vmatprep.mubr.f32.mxu0 0.0
        %932 = vmatmul.mubr.f32.gmra.mrb[0].mxu0 %v865
        %v933 = vpop.f32.mrb[0].mxu0
        %v934 = vadd.f32 %v862, %v933
        %v935 = vpop.f32.mrb[0].mxu0
        %936 = vdwg.mxu0
        %937 = vst.msk [vmem:[%s364] sm:$0xff] %vm375, %v934
        %s938 = sand.u32 %s197, 1
        %s939 = scalar_lea.sflag [#allocation8], %s938
        %s940 = sand.u32 %s197, 1
        %s941 = smul.addr %s940, 8
        %s942 = scalar_lea.vmem [#allocation12], %s941
        // Predicated region
        $region61: #{tpu_custom_call.1} parent=47 // pred_check
          %p943 = pneg %p207
        $region62: #{tpu_custom_call.1} parent=47 // pred_check_branch
          %945 = sbr.rel (%p943) target = $region64
        $region63: #{tpu_custom_call.1} parent=47 // pred_region
          %s947 = ssub.s32 128, 128
          %948 = vsyncadd %s939, %s947
          %s949 = smul.addr %s27, 128
          %s950 = scalar_lea.hbm %s7, %s949
          %s952 = sshll.u32 %s942, 4
          %s953 = int_to_ptr.vmem [resolvable:$true] %s952
          %955 = dma.vmem_to_hbm [thread:$0]  %s953, 128, %s950, %s939
        $region64: #{tpu_custom_call.1} parent=47 // pred_fallthru
          _
      $region48: #{tpu_custom_call.1} parent=5 // pred_fallthru
        _
      %p956 = scmp.le.s32.totalorder 2, %s22
      // Predicated region
      $region65: #{tpu_custom_call.1} parent=5 // pred_check
        %p957 = pneg %p956
      $region66: #{tpu_custom_call.1} parent=5 // pred_check_branch
        %959 = sbr.rel (%p957) target = $region68
      $region67: #{tpu_custom_call.1} parent=5 // pred_region
        %s960 = ssub.s32 %s22, 2
        // Predicated region
        $region69: #{tpu_custom_call.1} parent=67 // pred_check
          %p961 = pneg %p213
        $region70: #{tpu_custom_call.1} parent=67 // pred_check_branch
          %963 = sbr.rel (%p961) target = $region72
        $region71: #{tpu_custom_call.1} parent=67 // pred_region
          %s964 = sand.u32 %s198, 1
          %s965 = scalar_lea.sflag [#allocation8], %s964
          %s966 = sand.u32 %s198, 1
          %s967 = smul.addr %s966, 8
          %s968 = scalar_lea.vmem [#allocation12], %s967
          %969 = dma.done %s965, 128
        $region72: #{tpu_custom_call.1} parent=67 // pred_fallthru
          _
      $region68: #{tpu_custom_call.1} parent=5 // pred_fallthru
        _
    $region6: #{tpu_custom_call.1} parent=1 // loop_footer
      %s26 = sadd.s32 1, %s22
    $region7: #{tpu_custom_call.1} parent=1 // loop_footer_branch
      %21 = sbr.rel target = $region3
    $region8: #{tpu_custom_call.1} parent=1 // loop_exit
      _
    %970 = vsyncpa [#allocation7], 1
    %s971 = scalar_lea.sflag [#allocation7], 1
    %972 = vsyncpa %s971, 1
    %973 = vsyncpa [#allocation10], 1
    %s974 = scalar_lea.sflag [#allocation10], 1
    %975 = vsyncpa %s974, 1
    %976 = vsyncpa [#allocation8], 1
    %s977 = scalar_lea.sflag [#allocation8], 1
    %978 = vsyncpa %s977, 1

</llo_original>
